<compile_context>
chip_gen: v5e
topology: v5e:2x2
jax: 0.10.0
libtpu: 0.0.40
codegen_flags: <defaults>
</compile_context>

<pallas_src>
from functools import partial

import jax
import jax.numpy as jnp
from jax.experimental import pallas as pl
from jax.experimental.pallas import tpu as pltpu


# ---------------------------------------------------------------------------
# Kernel: one batch tile, whole (folded) 5-layer network.
#   x_ref : (B_TILE, F)  activations in natural layout, io dtype
#   w_ref : (5, F, F)    zero-padded weights, pre-transposed to (in, out), f32
#   b_ref : (5, 1, F)    zero-padded biases (row vectors), f32
#   o_ref : (B_TILE, D)  output tile, x.dtype
# ---------------------------------------------------------------------------
def _autoencoder_kernel(x_ref, w_ref, b_ref, o_ref):
    d_out = o_ref.shape[-1]
    h = x_ref[...].astype(jnp.float32)                        # (Bt, F) f32
    for layer in range(5):                                     # unrolled
        h = jnp.dot(h, w_ref[layer],
                    preferred_element_type=jnp.float32) + b_ref[layer]
        if layer < 4:                                          # no ReLU after final layer
            h = jnp.maximum(h, 0.0)
    o_ref[...] = h[:, :d_out].astype(o_ref.dtype)


# ---------------------------------------------------------------------------
# Host-side parameter packing (call ONCE per set of weights): fold W3·W4 (no
# ReLU between them) and zero-pad all layers into two slabs.
# params: 6 (W, b) pairs in torch layout, W = (out, in), b = (out,).
# ---------------------------------------------------------------------------
def pack_params(params, input_dim):
    (w1, b1), (w2, b2), (w3, b3), (w4, b4), (w5, b5), (w6, b6) = params

    # y = W4 @ (W3 @ x + b3) + b4 == (W4 @ W3) @ x + (W4 @ b3 + b4)   (exact fold)
    w34 = jnp.dot(w4, w3, preferred_element_type=jnp.float32)               # (8, 8)
    b34 = jnp.dot(w4, b3[:, None], preferred_element_type=jnp.float32)[:, 0] + b4

    layers = [(w1, b1), (w2, b2), (w34, b34), (w5, b5), (w6, b6)]

    # Padded feature width: covers input_dim and every hidden dim, multiple of 8.
    f = max(16, input_dim)
    f = ((f + 7) // 8) * 8

    w_slab = jnp.zeros((5, f, f), jnp.float32)
    b_slab = jnp.zeros((5, 1, f), jnp.float32)
    for l, (w, b) in enumerate(layers):
        o, i = w.shape
        w_slab = w_slab.at[l, :i, :o].set(w.T.astype(jnp.float32))   # (in, out) layout
        b_slab = b_slab.at[l, 0, :o].set(b.astype(jnp.float32))
    return w_slab, b_slab


def _batch_tiling(batch):
    """Batch-tile size and grid length.  Small batches: one sublane-aligned
    tile.  batch >= 256: multiple-of-128 tiles capped at 1024 with >= 2 tiles
    so both v7x TensorCores get work."""
    if batch < 256:
        tile = 8 * (-(-batch // 8))
        return tile, 1
    tile = min(1024, 128 * (batch // 256))
    return tile, -(-batch // tile)


# ---------------------------------------------------------------------------
# Forward wrapper (jitted so the pad / slice fuse and never run stand-alone).
# ---------------------------------------------------------------------------
@partial(jax.jit, static_argnames=("io_dtype",))
def autoencoder_forward(x, w_slab, b_slab, io_dtype=jnp.float32):
    """x: (B, input_dim).  w_slab/b_slab from pack_params().  io_dtype: dtype
    used for the activation DMA into the kernel (bf16 halves HBM read traffic
    on v6e/v7x; compute stays f32 either way)."""
    batch, d = x.shape
    f = w_slab.shape[-1]

    b_tile, n_tiles = _batch_tiling(batch)
    b_pad = b_tile * n_tiles

    # (Usually a no-op) zero-pad to the tiled shape; fuses under jit.
    x_p = jnp.pad(x, ((0, b_pad - batch), (0, f - d))).astype(io_dtype)

    dims_fused = [(d, 16), (16, 8), (8, 8), (8, 16), (16, d)]
    cost = pl.CostEstimate(
        flops=2 * b_pad * sum(i * o for i, o in dims_fused),
        transcendentals=0,
        bytes_accessed=(x_p.size * x_p.dtype.itemsize
                        + b_pad * d * x.dtype.itemsize
                        + 4 * (w_slab.size + b_slab.size)),
    )

    out = pl.pallas_call(
        _autoencoder_kernel,
        out_shape=jax.ShapeDtypeStruct((b_pad, d), x.dtype),
        grid=(n_tiles,),
        in_specs=[
            pl.BlockSpec((b_tile, f), lambda i: (i, 0)),     # activations: tiled over batch
            pl.BlockSpec((5, f, f), lambda i: (0, 0, 0)),    # weight slab: VMEM-resident
            pl.BlockSpec((5, 1, f), lambda i: (0, 0, 0)),    # bias slab:   VMEM-resident
        ],
        out_specs=pl.BlockSpec((b_tile, d), lambda i: (i, 0)),
        compiler_params=pltpu.CompilerParams(
            dimension_semantics=("parallel",)),
        cost_estimate=cost,
    )(x_p, w_slab, b_slab)

    return out[:batch]


# ---------------------------------------------------------------------------
# Parameter init mirroring nn.Linear defaults, torch (out, in) weight layout.
# ---------------------------------------------------------------------------
def init_params(key, input_dim):
    dims = [(input_dim, 16), (16, 8), (8, 4),      # encoder
            (4, 8), (8, 16), (16, input_dim)]      # decoder
    params = []
    for fan_in, fan_out in dims:
        key, kw, kb = jax.random.split(key, 3)
        bound = 1.0 / (fan_in ** 0.5)
        w = jax.random.uniform(kw, (fan_out, fan_in), jnp.float32, -bound, bound)
        b = jax.random.uniform(kb, (fan_out,), jnp.float32, -bound, bound)
        params.append((w, b))
    return params


def reference_forward(x, params):
    h = x
    for idx, (w, b) in enumerate(params):
        h = h @ w.T + b
        if idx not in (2, 5):        # ReLU everywhere except encoder/decoder outputs
            h = jnp.maximum(h, 0.0)
    return h


if __name__ == "__main__":
    key = jax.random.PRNGKey(0)
    input_dim = 32
    batch = 8

    kx, kp = jax.random.split(key)
    x = jax.random.normal(kx, (batch, input_dim), jnp.float32)
    params = init_params(kp, input_dim)

    # Pack (and fold) parameters ONCE, outside the per-call path.
    w_slab, b_slab = pack_params(params, input_dim)

    # f32 end-to-end (safe default; recommended on v5e).
    out = jax.block_until_ready(autoencoder_forward(x, w_slab, b_slab))
    ref = reference_forward(x, params)
    assert out.shape == (batch, input_dim)
    # atol relaxed vs 1e-5: the W3·W4 fold changes rounding order (same math).
    assert jnp.allclose(out, ref, atol=1e-4, rtol=1e-4), "f32 mismatch vs JAX reference"

    # bf16-at-the-HBM-boundary option (v6e / v7x): input DMA'd as bf16, compute f32.
    out_bf16 = jax.block_until_ready(
        autoencoder_forward(x, w_slab, b_slab, io_dtype=jnp.bfloat16))
    ref_bf16 = reference_forward(x.astype(jnp.bfloat16).astype(jnp.float32), params)
    assert jnp.allclose(out_bf16, ref_bf16, atol=1e-3, rtol=1e-3), "bf16-I/O mismatch"

    # Larger batch: exercises the multi-tile grid (>= 2 tiles -> both v7x TCs).
    xl = jax.random.normal(kx, (512, input_dim), jnp.float32)
    out_l = jax.block_until_ready(autoencoder_forward(xl, w_slab, b_slab))
    ref_l = reference_forward(xl, params)
    assert jnp.allclose(out_l, ref_l, atol=1e-4, rtol=1e-4), "multi-tile mismatch"

    print("KERNEL_OK")
</pallas_src>

<mosaic_0001>
module attributes {stable_mosaic.version = 11 : i64} {
  func.func @_autoencoder_kernel(%arg0: i32, %arg1: memref<8x32xf32, #tpu.memory_space<vmem>>, %arg2: memref<5x32x32xf32, #tpu.memory_space<vmem>>, %arg3: memref<5x1x32xf32, #tpu.memory_space<vmem>>, %arg4: memref<8x32xf32, #tpu.memory_space<vmem>>) attributes {dimension_semantics = [#tpu.dimension_semantics<parallel>], iteration_bounds = array<i64: 1>, scalar_prefetch = 0 : i64, scratch_operands = 0 : i64, tpu.core_type = #tpu.core_type<tc>, window_params = [{transform_indices = @transform_0, window_bounds = array<i64: 8, 32>}, {pipeline_mode = #tpu.pipeline_mode<synchronous>, transform_indices = @transform_1, window_bounds = array<i64: 5, 32, 32>}, {pipeline_mode = #tpu.pipeline_mode<synchronous>, transform_indices = @transform_2, window_bounds = array<i64: 5, 1, 32>}, {transform_indices = @transform_3, window_bounds = array<i64: 8, 32>}]} {
    %c0 = arith.constant 0 : index
    %c0_0 = arith.constant 0 : index
    %0 = vector.load %arg1[%c0, %c0_0] : memref<8x32xf32, #tpu.memory_space<vmem>>, vector<8x32xf32>
    %c0_1 = arith.constant 0 : index
    %c0_2 = arith.constant 0 : index
    %c0_3 = arith.constant 0 : index
    %1 = vector.load %arg2[%c0_1, %c0_2, %c0_3] : memref<5x32x32xf32, #tpu.memory_space<vmem>>, vector<1x32x32xf32>
    %2 = vector.shape_cast %1 : vector<1x32x32xf32> to vector<32x32xf32>
    %cst = arith.constant dense<0.000000e+00> : vector<8x32xf32>
    %3 = tpu.matmul %0, %2, %cst {dimension_numbers = #tpu.dot_dimension_numbers<[1], [0], [0], [1], [0, 0, 1, 1], [], []>} : vector<8x32xf32>, vector<32x32xf32>, vector<8x32xf32> -> vector<8x32xf32>
    %c0_4 = arith.constant 0 : index
    %c0_5 = arith.constant 0 : index
    %c0_6 = arith.constant 0 : index
    %4 = vector.load %arg3[%c0_4, %c0_5, %c0_6] : memref<5x1x32xf32, #tpu.memory_space<vmem>>, vector<1x1x32xf32>
    %5 = vector.shape_cast %4 : vector<1x1x32xf32> to vector<1x32xf32>
    %6 = vector.broadcast %5 : vector<1x32xf32> to vector<8x32xf32>
    %7 = arith.addf %3, %6 : vector<8x32xf32>
    %cst_7 = arith.constant 0.000000e+00 : f32
    %8 = vector.broadcast %cst_7 : f32 to vector<8x32xf32>
    %9 = arith.maximumf %7, %8 : vector<8x32xf32>
    %c1 = arith.constant 1 : index
    %c0_8 = arith.constant 0 : index
    %c0_9 = arith.constant 0 : index
    %10 = vector.load %arg2[%c1, %c0_8, %c0_9] : memref<5x32x32xf32, #tpu.memory_space<vmem>>, vector<1x32x32xf32>
    %11 = vector.shape_cast %10 : vector<1x32x32xf32> to vector<32x32xf32>
    %cst_10 = arith.constant dense<0.000000e+00> : vector<8x32xf32>
    %12 = tpu.matmul %9, %11, %cst_10 {dimension_numbers = #tpu.dot_dimension_numbers<[1], [0], [0], [1], [0, 0, 1, 1], [], []>} : vector<8x32xf32>, vector<32x32xf32>, vector<8x32xf32> -> vector<8x32xf32>
    %c1_11 = arith.constant 1 : index
    %c0_12 = arith.constant 0 : index
    %c0_13 = arith.constant 0 : index
    %13 = vector.load %arg3[%c1_11, %c0_12, %c0_13] : memref<5x1x32xf32, #tpu.memory_space<vmem>>, vector<1x1x32xf32>
    %14 = vector.shape_cast %13 : vector<1x1x32xf32> to vector<1x32xf32>
    %15 = vector.broadcast %14 : vector<1x32xf32> to vector<8x32xf32>
    %16 = arith.addf %12, %15 : vector<8x32xf32>
    %cst_14 = arith.constant 0.000000e+00 : f32
    %17 = vector.broadcast %cst_14 : f32 to vector<8x32xf32>
    %18 = arith.maximumf %16, %17 : vector<8x32xf32>
    %c2 = arith.constant 2 : index
    %c0_15 = arith.constant 0 : index
    %c0_16 = arith.constant 0 : index
    %19 = vector.load %arg2[%c2, %c0_15, %c0_16] : memref<5x32x32xf32, #tpu.memory_space<vmem>>, vector<1x32x32xf32>
    %20 = vector.shape_cast %19 : vector<1x32x32xf32> to vector<32x32xf32>
    %cst_17 = arith.constant dense<0.000000e+00> : vector<8x32xf32>
    %21 = tpu.matmul %18, %20, %cst_17 {dimension_numbers = #tpu.dot_dimension_numbers<[1], [0], [0], [1], [0, 0, 1, 1], [], []>} : vector<8x32xf32>, vector<32x32xf32>, vector<8x32xf32> -> vector<8x32xf32>
    %c2_18 = arith.constant 2 : index
    %c0_19 = arith.constant 0 : index
    %c0_20 = arith.constant 0 : index
    %22 = vector.load %arg3[%c2_18, %c0_19, %c0_20] : memref<5x1x32xf32, #tpu.memory_space<vmem>>, vector<1x1x32xf32>
    %23 = vector.shape_cast %22 : vector<1x1x32xf32> to vector<1x32xf32>
    %24 = vector.broadcast %23 : vector<1x32xf32> to vector<8x32xf32>
    %25 = arith.addf %21, %24 : vector<8x32xf32>
    %cst_21 = arith.constant 0.000000e+00 : f32
    %26 = vector.broadcast %cst_21 : f32 to vector<8x32xf32>
    %27 = arith.maximumf %25, %26 : vector<8x32xf32>
    %c3 = arith.constant 3 : index
    %c0_22 = arith.constant 0 : index
    %c0_23 = arith.constant 0 : index
    %28 = vector.load %arg2[%c3, %c0_22, %c0_23] : memref<5x32x32xf32, #tpu.memory_space<vmem>>, vector<1x32x32xf32>
    %29 = vector.shape_cast %28 : vector<1x32x32xf32> to vector<32x32xf32>
    %cst_24 = arith.constant dense<0.000000e+00> : vector<8x32xf32>
    %30 = tpu.matmul %27, %29, %cst_24 {dimension_numbers = #tpu.dot_dimension_numbers<[1], [0], [0], [1], [0, 0, 1, 1], [], []>} : vector<8x32xf32>, vector<32x32xf32>, vector<8x32xf32> -> vector<8x32xf32>
    %c3_25 = arith.constant 3 : index
    %c0_26 = arith.constant 0 : index
    %c0_27 = arith.constant 0 : index
    %31 = vector.load %arg3[%c3_25, %c0_26, %c0_27] : memref<5x1x32xf32, #tpu.memory_space<vmem>>, vector<1x1x32xf32>
    %32 = vector.shape_cast %31 : vector<1x1x32xf32> to vector<1x32xf32>
    %33 = vector.broadcast %32 : vector<1x32xf32> to vector<8x32xf32>
    %34 = arith.addf %30, %33 : vector<8x32xf32>
    %cst_28 = arith.constant 0.000000e+00 : f32
    %35 = vector.broadcast %cst_28 : f32 to vector<8x32xf32>
    %36 = arith.maximumf %34, %35 : vector<8x32xf32>
    %c4 = arith.constant 4 : index
    %c0_29 = arith.constant 0 : index
    %c0_30 = arith.constant 0 : index
    %37 = vector.load %arg2[%c4, %c0_29, %c0_30] : memref<5x32x32xf32, #tpu.memory_space<vmem>>, vector<1x32x32xf32>
    %38 = vector.shape_cast %37 : vector<1x32x32xf32> to vector<32x32xf32>
    %cst_31 = arith.constant dense<0.000000e+00> : vector<8x32xf32>
    %39 = tpu.matmul %36, %38, %cst_31 {dimension_numbers = #tpu.dot_dimension_numbers<[1], [0], [0], [1], [0, 0, 1, 1], [], []>} : vector<8x32xf32>, vector<32x32xf32>, vector<8x32xf32> -> vector<8x32xf32>
    %c4_32 = arith.constant 4 : index
    %c0_33 = arith.constant 0 : index
    %c0_34 = arith.constant 0 : index
    %40 = vector.load %arg3[%c4_32, %c0_33, %c0_34] : memref<5x1x32xf32, #tpu.memory_space<vmem>>, vector<1x1x32xf32>
    %41 = vector.shape_cast %40 : vector<1x1x32xf32> to vector<1x32xf32>
    %42 = vector.broadcast %41 : vector<1x32xf32> to vector<8x32xf32>
    %43 = arith.addf %39, %42 : vector<8x32xf32>
    %c0_35 = arith.constant 0 : index
    %c0_36 = arith.constant 0 : index
    %44 = vector.load %arg4[%c0_35, %c0_36] : memref<8x32xf32, #tpu.memory_space<vmem>>, vector<8x32xf32>
    tpu.vector_store %arg4[%c0_35, %c0_36], %43 {strides = array<i32>} : memref<8x32xf32, #tpu.memory_space<vmem>>, vector<8x32xf32>,
    return
  }
  func.func @transform_0(%arg0: i32) -> (i32, i32) {
    %c0_i32 = arith.constant 0 : i32
    %c0_i32_0 = arith.constant 0 : i32
    return %arg0, %c0_i32 : i32, i32
  }
  func.func @transform_1(%arg0: i32) -> (i32, i32, i32) {
    %c0_i32 = arith.constant 0 : i32
    %c0_i32_0 = arith.constant 0 : i32
    %c0_i32_1 = arith.constant 0 : i32
    %c0_i32_2 = arith.constant 0 : i32
    return %c0_i32, %c0_i32_0, %c0_i32_1 : i32, i32, i32
  }
  func.func @transform_2(%arg0: i32) -> (i32, i32, i32) {
    %c0_i32 = arith.constant 0 : i32
    %c0_i32_0 = arith.constant 0 : i32
    %c0_i32_1 = arith.constant 0 : i32
    %c0_i32_2 = arith.constant 0 : i32
    return %c0_i32, %c0_i32_0, %c0_i32_1 : i32, i32, i32
  }
  func.func @transform_3(%arg0: i32) -> (i32, i32) {
    %c0_i32 = arith.constant 0 : i32
    %c0_i32_0 = arith.constant 0 : i32
    return %arg0, %c0_i32 : i32, i32
  }
}

</mosaic_0001>

<llo_original>
// kernel: autoencoder_forward.1
$region0: #{autoencoder_forward.1}
  #allocation0 [shape = 'u32[]', space=smem, size = 0x4, offset = 0x4, fixed_abs, tag = 'smem constant byte address 0x4 - core index']
  #allocation1 [shape = 'u32[72,128]{1,0:T(1,128)}', space=vmem, size = 0x9000, scoped, tag = 'internal scratch']
  %s0 = inlined_call_operand.hbm [shape: f32[8,32], index: 0, kind: input, shape index: {}]
  %s1 = inlined_call_operand.hbm [shape: f32[5,32,32], index: 1, kind: input, shape index: {}]
  %s2 = inlined_call_operand.hbm [shape: f32[5,1,32], index: 2, kind: input, shape index: {}]
  %s3 = inlined_call_operand.hbm [shape: f32[8,32], index: 3, kind: output, shape index: {}]
  %s4 = sld [smem:[#allocation0]]
  $region34: #{autoencoder_forward.1} parent=0
    _
  %s6 = ssub.s32 1, %s4
  %s7 = scalar_select 0, %s6, %s4
  $region1: #{autoencoder_forward.1} parent=0
    #allocation2 [shape = 'u8[4096]{0}', space=vmem, size = 0x1000, scoped, tag = 'input window, operand 0, single buffered']
    #allocation3 [shape = 's32[1]{0}', space=sflag, size = 0x4, scoped, tag = 'scoped memory for autoencoder_forward.1']
    #allocation4 [shape = 's32[1]{0}', space=sflag, size = 0x4, scoped, tag = 'scoped memory for autoencoder_forward.1']
    #allocation5 [shape = 'u8[81920]{0}', space=vmem, size = 0x14000, scoped, tag = 'input window, operand 1, single buffered']
    #allocation6 [shape = 's32[1]{0}', space=sflag, size = 0x4, scoped, tag = 'scoped memory for autoencoder_forward.1']
    #allocation7 [shape = 'u8[2560]{0}', space=vmem, size = 0xc00, scoped, tag = 'input window, operand 2, single buffered']
    #allocation8 [shape = 'u8[4096]{0}', space=vmem, size = 0x1000, scoped, tag = 'output window, operand 0, single buffered']
    %8 = vsyncpa [#allocation3], 0
    %9 = vsyncpa [#allocation6], 0
    %10 = vsyncpa [#allocation4], 0
    // Predicated region
    $region2: #{autoencoder_forward.1} parent=1 // pred_check
      _
    $region3: #{autoencoder_forward.1} parent=1 // pred_check_branch
      %12 = sbr.rel (0) target = $region5
    $region4: #{autoencoder_forward.1} parent=1 // pred_region
      %14 = vsyncadd [#allocation3], 0
      %s16 = sshll.u32 %s0, 4
      %s17 = int_to_ptr.hbm [resolvable:$true] %s16
      %s18 = sshll.u32 [#allocation2], 4
      %s19 = int_to_ptr.vmem [resolvable:$true] %s18
      %21 = dma.hbm_to_vmem [thread:$0]  %s17, 128, %s19, [#allocation3]
    $region5: #{autoencoder_forward.1} parent=1 // pred_fallthru
      _
    // Predicated region
    $region6: #{autoencoder_forward.1} parent=1 // pred_check
      _
    $region7: #{autoencoder_forward.1} parent=1 // pred_check_branch
      %23 = sbr.rel (0) target = $region9
    $region8: #{autoencoder_forward.1} parent=1 // pred_region
      %25 = vsyncadd [#allocation6], 0
      %s26 = sshll.u32 %s1, 4
      %s27 = int_to_ptr.hbm [resolvable:$true] %s26
      %s28 = sshll.u32 [#allocation5], 4
      %s29 = int_to_ptr.vmem [resolvable:$true] %s28
      %34 = dma.hbm_to_vmem [thread:$0]  %s27, 2560, %s29, [#allocation6], 128, 128, 8
    $region9: #{autoencoder_forward.1} parent=1 // pred_fallthru
      _
    // Predicated region
    $region10: #{autoencoder_forward.1} parent=1 // pred_check
      _
    $region11: #{autoencoder_forward.1} parent=1 // pred_check_branch
      %36 = sbr.rel (0) target = $region13
    $region12: #{autoencoder_forward.1} parent=1 // pred_region
      %38 = vsyncadd [#allocation6], 0
      %s39 = sshll.u32 %s2, 4
      %s40 = int_to_ptr.hbm [resolvable:$true] %s39
      %s41 = sshll.u32 [#allocation7], 4
      %s42 = int_to_ptr.vmem [resolvable:$true] %s41
      %47 = dma.hbm_to_vmem [thread:$0]  %s40, 80, %s42, [#allocation6], 16, 16, 1
    $region13: #{autoencoder_forward.1} parent=1 // pred_fallthru
      _
    // Predicated region
    $region14: #{autoencoder_forward.1} parent=1 // pred_check
      _
    $region15: #{autoencoder_forward.1} parent=1 // pred_check_branch
      %49 = sbr.rel (0) target = $region17
    $region16: #{autoencoder_forward.1} parent=1 // pred_region
      %51 = dma.done [#allocation3], 128
    $region17: #{autoencoder_forward.1} parent=1 // pred_fallthru
      _
    // Predicated region
    $region18: #{autoencoder_forward.1} parent=1 // pred_check
      _
    $region19: #{autoencoder_forward.1} parent=1 // pred_check_branch
      %53 = sbr.rel (0) target = $region21
    $region20: #{autoencoder_forward.1} parent=1 // pred_region
      %55 = dma.done [#allocation6], 2560
    $region21: #{autoencoder_forward.1} parent=1 // pred_fallthru
      _
    // Predicated region
    $region22: #{autoencoder_forward.1} parent=1 // pred_check
      _
    $region23: #{autoencoder_forward.1} parent=1 // pred_check_branch
      %57 = sbr.rel (0) target = $region25
    $region24: #{autoencoder_forward.1} parent=1 // pred_region
      %59 = dma.done [#allocation6], 80
    $region25: #{autoencoder_forward.1} parent=1 // pred_fallthru
      _
    %v60 = vld [vmem:[#allocation2] sm:$0xff]
    %v61 = vld [vmem:[#allocation5] sm:$0xff]
    %v62 = vld [vmem:[#allocation5 + $0x8] sm:$0xff]
    %v63 = vld [vmem:[#allocation5 + $0x10] sm:$0xff]
    %v64 = vld [vmem:[#allocation5 + $0x18] sm:$0xff]
    %v65 = vld [vmem:[#allocation7] sm:$0x1]
    %v67 = vperm.slane %v65, 0
    %vm69 = vcmask 261120
    %v71 = vsel %vm69, %v60, 0
    %73 = vmatpush.msra.mxu0 0.0
    %74 = vmatpush.msra.mxu0 0.0
    %75 = vmatpush.msra.mxu0 0.0
    %76 = vmatpush.msra.mxu0 0.0
    %77 = vmatpush.msra.mxu0 0.0
    %78 = vmatpush.msra.mxu0 0.0
    %79 = vmatpush.msra.mxu0 0.0
    %80 = vmatpush.msra.mxu0 0.0
    %81 = vmatpush.msra.mxu0 0.0
    %82 = vmatpush.msra.mxu0 0.0
    %83 = vmatpush.msra.mxu0 0.0
    %84 = vmatpush.msra.mxu0 0.0
    %85 = vmatpush.msra.mxu0 %v64
    %86 = vmatpush.msra.mxu0 %v63
    %87 = vmatpush.msra.mxu0 %v62
    %88 = vmatpush.msra.mxu0 %v61
    %89 = vmatmul.f32.gmra.mxu0 %v71
    %v90 = vpop.f32.mrf.mxu0
    %v91 = vadd.f32 %v67, %v90
    %92 = vdwg.mxu0
    %v93 = vmax.f32 %v91, 0.0
    %s94 = scalar_lea.vmem [#allocation5], 32
    %v95 = vld [vmem:[%s94] sm:$0xff]
    %v96 = vld [vmem:[%s94 + $0x8] sm:$0xff]
    %v97 = vld [vmem:[%s94 + $0x10] sm:$0xff]
    %v98 = vld [vmem:[%s94 + $0x18] sm:$0xff]
    %s99 = scalar_lea.vmem [#allocation7], 1
    %v100 = vld [vmem:[%s99] sm:$0x1]
    %v102 = vperm.slane %v100, 0
    %v105 = vsel %vm69, %v93, 0
    %107 = vmatpush.msra.mxu0 0.0
    %108 = vmatpush.msra.mxu0 0.0
    %109 = vmatpush.msra.mxu0 0.0
    %110 = vmatpush.msra.mxu0 0.0
    %111 = vmatpush.msra.mxu0 0.0
    %112 = vmatpush.msra.mxu0 0.0
    %113 = vmatpush.msra.mxu0 0.0
    %114 = vmatpush.msra.mxu0 0.0
    %115 = vmatpush.msra.mxu0 0.0
    %116 = vmatpush.msra.mxu0 0.0
    %117 = vmatpush.msra.mxu0 0.0
    %118 = vmatpush.msra.mxu0 0.0
    %119 = vmatpush.msra.mxu0 %v98
    %120 = vmatpush.msra.mxu0 %v97
    %121 = vmatpush.msra.mxu0 %v96
    %122 = vmatpush.msra.mxu0 %v95
    %123 = vmatmul.f32.gmra.mxu0 %v105
    %v124 = vpop.f32.mrf.mxu0
    %v125 = vadd.f32 %v102, %v124
    %126 = vdwg.mxu0
    %v127 = vmax.f32 %v125, 0.0
    %s128 = scalar_lea.vmem [#allocation5], 64
    %v129 = vld [vmem:[%s128] sm:$0xff]
    %v130 = vld [vmem:[%s128 + $0x8] sm:$0xff]
    %v131 = vld [vmem:[%s128 + $0x10] sm:$0xff]
    %v132 = vld [vmem:[%s128 + $0x18] sm:$0xff]
    %s133 = scalar_lea.vmem [#allocation7], 2
    %v134 = vld [vmem:[%s133] sm:$0x1]
    %v136 = vperm.slane %v134, 0
    %v139 = vsel %vm69, %v127, 0
    %141 = vmatpush.msra.mxu0 0.0
    %142 = vmatpush.msra.mxu0 0.0
    %143 = vmatpush.msra.mxu0 0.0
    %144 = vmatpush.msra.mxu0 0.0
    %145 = vmatpush.msra.mxu0 0.0
    %146 = vmatpush.msra.mxu0 0.0
    %147 = vmatpush.msra.mxu0 0.0
    %148 = vmatpush.msra.mxu0 0.0
    %149 = vmatpush.msra.mxu0 0.0
    %150 = vmatpush.msra.mxu0 0.0
    %151 = vmatpush.msra.mxu0 0.0
    %152 = vmatpush.msra.mxu0 0.0
    %153 = vmatpush.msra.mxu0 %v132
    %154 = vmatpush.msra.mxu0 %v131
    %155 = vmatpush.msra.mxu0 %v130
    %156 = vmatpush.msra.mxu0 %v129
    %157 = vmatmul.f32.gmra.mxu0 %v139
    %v158 = vpop.f32.mrf.mxu0
    %v159 = vadd.f32 %v136, %v158
    %160 = vdwg.mxu0
    %v161 = vmax.f32 %v159, 0.0
    %s162 = scalar_lea.vmem [#allocation5], 96
    %v163 = vld [vmem:[%s162] sm:$0xff]
    %v164 = vld [vmem:[%s162 + $0x8] sm:$0xff]
    %v165 = vld [vmem:[%s162 + $0x10] sm:$0xff]
    %v166 = vld [vmem:[%s162 + $0x18] sm:$0xff]
    %s167 = scalar_lea.vmem [#allocation7], 3
    %v168 = vld [vmem:[%s167] sm:$0x1]
    %v170 = vperm.slane %v168, 0
    %v173 = vsel %vm69, %v161, 0
    %175 = vmatpush.msra.mxu0 0.0
    %176 = vmatpush.msra.mxu0 0.0
    %177 = vmatpush.msra.mxu0 0.0
    %178 = vmatpush.msra.mxu0 0.0
    %179 = vmatpush.msra.mxu0 0.0
    %180 = vmatpush.msra.mxu0 0.0
    %181 = vmatpush.msra.mxu0 0.0
    %182 = vmatpush.msra.mxu0 0.0
    %183 = vmatpush.msra.mxu0 0.0
    %184 = vmatpush.msra.mxu0 0.0
    %185 = vmatpush.msra.mxu0 0.0
    %186 = vmatpush.msra.mxu0 0.0
    %187 = vmatpush.msra.mxu0 %v166
    %188 = vmatpush.msra.mxu0 %v165
    %189 = vmatpush.msra.mxu0 %v164
    %190 = vmatpush.msra.mxu0 %v163
    %191 = vmatmul.f32.gmra.mxu0 %v173
    %v192 = vpop.f32.mrf.mxu0
    %v193 = vadd.f32 %v170, %v192
    %194 = vdwg.mxu0
    %v195 = vmax.f32 %v193, 0.0
    %s196 = scalar_lea.vmem [#allocation5], 128
    %v197 = vld [vmem:[%s196] sm:$0xff]
    %v198 = vld [vmem:[%s196 + $0x8] sm:$0xff]
    %v199 = vld [vmem:[%s196 + $0x10] sm:$0xff]
    %v200 = vld [vmem:[%s196 + $0x18] sm:$0xff]
    %s201 = scalar_lea.vmem [#allocation7], 4
    %v202 = vld [vmem:[%s201] sm:$0x1]
    %v204 = vperm.slane %v202, 0
    %v207 = vsel %vm69, %v195, 0
    %209 = vmatpush.msra.mxu0 0.0
    %210 = vmatpush.msra.mxu0 0.0
    %211 = vmatpush.msra.mxu0 0.0
    %212 = vmatpush.msra.mxu0 0.0
    %213 = vmatpush.msra.mxu0 0.0
    %214 = vmatpush.msra.mxu0 0.0
    %215 = vmatpush.msra.mxu0 0.0
    %216 = vmatpush.msra.mxu0 0.0
    %217 = vmatpush.msra.mxu0 0.0
    %218 = vmatpush.msra.mxu0 0.0
    %219 = vmatpush.msra.mxu0 0.0
    %220 = vmatpush.msra.mxu0 0.0
    %221 = vmatpush.msra.mxu0 %v200
    %222 = vmatpush.msra.mxu0 %v199
    %223 = vmatpush.msra.mxu0 %v198
    %224 = vmatpush.msra.mxu0 %v197
    %225 = vmatmul.f32.gmra.mxu0 %v207
    %v226 = vpop.f32.mrf.mxu0
    %v227 = vadd.f32 %v204, %v226
    %228 = vdwg.mxu0
    %229 = vst.msk [vmem:[#allocation8] sm:$0xff] %vm69, %v227
    // Predicated region
    $region26: #{autoencoder_forward.1} parent=1 // pred_check
      _
    $region27: #{autoencoder_forward.1} parent=1 // pred_check_branch
      %231 = sbr.rel (0) target = $region29
    $region28: #{autoencoder_forward.1} parent=1 // pred_region
      %233 = vsyncadd [#allocation4], 0
      %s235 = sshll.u32 [#allocation8], 4
      %s236 = int_to_ptr.vmem [resolvable:$true] %s235
      %s237 = sshll.u32 %s3, 4
      %s238 = int_to_ptr.hbm [resolvable:$true] %s237
      %240 = dma.vmem_to_hbm [thread:$0]  %s236, 128, %s238, [#allocation4]
    $region29: #{autoencoder_forward.1} parent=1 // pred_fallthru
      _
    // Predicated region
    $region30: #{autoencoder_forward.1} parent=1 // pred_check
      _
    $region31: #{autoencoder_forward.1} parent=1 // pred_check_branch
      %242 = sbr.rel (0) target = $region33
    $region32: #{autoencoder_forward.1} parent=1 // pred_region
      %244 = dma.done [#allocation4], 128
    $region33: #{autoencoder_forward.1} parent=1 // pred_fallthru
      _
    %245 = vsyncpa [#allocation3], 1
    %246 = vsyncpa [#allocation6], 1
    %247 = vsyncpa [#allocation4], 1

</llo_original>
